<compile_context>
chip_gen: v7x
topology: tpu7x:2x2x1
jax: 0.10.0
libtpu: 0.0.40
codegen_flags: <defaults>
</compile_context>

<pallas_src>
import functools

import jax
import jax.numpy as jnp
from jax import lax
from jax.experimental import pallas as pl
from jax.experimental.pallas import tpu as pltpu


def _focal_loss_kernel(logits_ref, target_ref, out_ref, *, gamma, n_rows, exp_bf16):
    # logits_ref: (TILE_N, C) float -> VMEM
    # target_ref: (TILE_N, 1) int32 -> VMEM
    # out_ref:    (1, 8, 128) f32   -> VMEM (per-tile partial sum, splatted)
    tile_n = logits_ref.shape[0]

    x = logits_ref[...].astype(jnp.float32)            # (TILE_N, C)
    t = target_ref[...]                                  # (TILE_N, 1) int32

    # Numerically stable log-sum-exp along the class (lane) axis.
    m = jnp.max(x, axis=-1, keepdims=True)               # (TILE_N, 1)
    z = x - m                                             # (TILE_N, C), z <= 0
    if exp_bf16:
        # v6e/v7x: exp over the full tile is the saturating EUP slot; the bf16
        # EUP path is ~2x. exp(z) in [0,1]; accumulate the sum in f32.
        e = jnp.exp(z.astype(jnp.bfloat16)).astype(jnp.float32)
    else:
        e = jnp.exp(z)
    lse = jnp.log(jnp.sum(e, axis=-1, keepdims=True))     # (TILE_N, 1)

    # CE = lse - z[target]; gather via masked sum (no full log-softmax tile).
    col = lax.broadcasted_iota(jnp.int32, x.shape, 1)      # (TILE_N, C)
    z_t = jnp.sum(jnp.where(col == t, z, 0.0), axis=-1, keepdims=True)
    ce = lse - z_t                                          # (TILE_N, 1)

    p = jnp.exp(-ce)                                        # (TILE_N, 1)
    one_minus_p = jnp.maximum(1.0 - p, 0.0)                 # guard fp slop for pow

    # gamma is a trace-time Python constant -> specialize the focal weight.
    if gamma == 0.0:
        focal_w = jnp.ones_like(one_minus_p)
    elif gamma == 1.0:
        focal_w = one_minus_p
    elif float(gamma).is_integer() and 1.0 < gamma <= 4.0:
        focal_w = one_minus_p
        for _ in range(int(gamma) - 1):
            focal_w = focal_w * one_minus_p
    else:
        focal_w = one_minus_p ** gamma                      # EUP log+exp, (TILE_N, 1)

    # Mask ragged rows of the last tile (N is a static constant -> no prefetch).
    # Keep this as a SELECT, not a multiply: garbage rows may be NaN/Inf.
    row = lax.broadcasted_iota(jnp.int32, (tile_n, 1), 0)
    valid = (pl.program_id(0) * tile_n + row) < n_rows
    loss = jnp.where(valid, focal_w * ce, 0.0)              # (TILE_N, 1)

    # Per-tile partial sum on the XLU; one lane-dense, unmasked store.
    tile_sum = jnp.sum(loss)
    out_ref[...] = jnp.broadcast_to(tile_sum, out_ref.shape)


def _vmem_capacity_bytes():
    """Physical VMEM per TensorCore; conservative fallback = v7x (64 MiB)."""
    try:
        return int(pltpu.get_tpu_info().vmem_capacity_bytes)
    except Exception:
        return 64 * 1024 * 1024


def _choose_tile_n(n, c, itemsize, vmem_cap):
    """Largest 8-aligned row tile whose double-buffered blocks fit the budget."""
    lanes = 128
    c_lanes = pl.cdiv(c, lanes) * lanes
    # Double-buffered per-row footprint: logits block + lane-padded int32 target
    # block (the (TILE_N, 1) target column pads to 128 lanes in VMEM).
    bytes_per_row = 2 * c_lanes * itemsize + 2 * lanes * 4
    budget = min(int(vmem_cap * 0.4), 40 * 1024 * 1024)     # v7x-safe, big on v5e/v6e
    tile = budget // bytes_per_row
    tile = max(8, min(4096, (tile // 8) * 8))
    if n >= 8:
        tile = min(tile, (n // 8) * 8)                       # never a block > N rows
    return tile


def focal_loss(logits, target, *, gamma=1.0, tile_n=None, exp_bf16=False,
               core_parallel=False):
    """logits: (N, C) float (f32 or bf16); target: (N,) int class idx. Returns scalar f32."""
    n, c = logits.shape
    itemsize = jnp.dtype(logits.dtype).itemsize
    vmem_cap = _vmem_capacity_bytes()
    if tile_n is None:
        tile_n = _choose_tile_n(n, c, itemsize, vmem_cap)
    assert tile_n % 8 == 0, "row tile must be sublane-aligned (multiple of 8)"

    num_tiles = pl.cdiv(n, tile_n)
    target2d = target.astype(jnp.int32).reshape(n, 1)

    if tile_n > n:
        # Tiny-N edge case only (single small tile): pad a handful of rows so the
        # 8-aligned block fits. Cost is negligible at this size; large N never pads.
        logits = jnp.pad(logits, ((0, tile_n - n), (0, 0)))
        target2d = jnp.pad(target2d, ((0, tile_n - n), (0, 0)))

    c_lanes = pl.cdiv(c, 128) * 128
    block_bytes = (2 * tile_n * c_lanes * itemsize      # double-buffered logits tiles
                   + 2 * tile_n * 128 * 4               # lane-padded target tiles
                   + 2 * 8 * 128 * 4)                   # output blocks
    vmem_limit = int(min(max(32 * 1024 * 1024, vmem_cap // 2, block_bytes + (8 << 20)),
                         vmem_cap * 7 // 8))

    if core_parallel:
        # v7x: shard the independent row tiles across both TensorCores.
        dims = (pltpu.CORE_PARALLEL,)
    else:
        dims = ("parallel",)

    per_tile = pl.pallas_call(
        functools.partial(_focal_loss_kernel, gamma=float(gamma), n_rows=n,
                          exp_bf16=bool(exp_bf16)),
        out_shape=jax.ShapeDtypeStruct((num_tiles, 8, 128), jnp.float32),
        grid=(num_tiles,),
        in_specs=[
            pl.BlockSpec((tile_n, c), lambda i: (i, 0)),   # logits row tile
            pl.BlockSpec((tile_n, 1), lambda i: (i, 0)),   # target row tile
        ],
        out_specs=pl.BlockSpec((1, 8, 128), lambda i: (i, 0, 0)),
        compiler_params=pltpu.CompilerParams(
            dimension_semantics=dims,
            vmem_limit_bytes=vmem_limit,
        ),
        cost_estimate=pl.CostEstimate(
            flops=6 * n * c + 10 * n,
            transcendentals=n * c + 2 * n,
            bytes_accessed=n * c * itemsize + n * 4 + num_tiles * 8 * 128 * 4,
        ),
    )(logits, target2d)

    # Each tile splatted its partial sum across its (1, 8, 128) block; sum the
    # num_tiles scalars (tiny, fused by XLA).
    return jnp.sum(per_tile[:, 0, 0])


def _focal_loss_ref(logits, target, gamma=1.0):
    # Pure-JAX reference for sanity checking.
    logp = jax.nn.log_softmax(logits.astype(jnp.float32), axis=-1)
    ce = -jnp.take_along_axis(logp, target[:, None].astype(jnp.int32), axis=-1)[:, 0]
    p = jnp.exp(-ce)
    return jnp.sum((1.0 - p) ** gamma * ce)


if __name__ == "__main__":
    key = jax.random.PRNGKey(0)
    k_logits, k_target = jax.random.split(key)

    N, C = 45, 32          # N not a multiple of the tile -> exercises the ragged-tile mask
    TILE_N = 16            # small tile so the grid has multiple steps

    logits = jax.random.normal(k_logits, (N, C), dtype=jnp.float32)
    target = jax.random.randint(k_target, (N,), 0, C, dtype=jnp.int32)

    # f32 logits: gamma = 1 (no pow), 2 (repeated multiply), 1.5 (fractional pow).
    for gamma in (1.0, 2.0, 1.5):
        out = jax.block_until_ready(focal_loss(logits, target, gamma=gamma, tile_n=TILE_N))
        ref = _focal_loss_ref(logits, target, gamma=gamma)
        assert jnp.allclose(out, ref, rtol=1e-5, atol=1e-5), (gamma, out, ref)

    # Auto-chosen tile (generation-aware budget), no wrapper pad, ragged last tile.
    out_auto = jax.block_until_ready(focal_loss(logits, target, gamma=1.0))
    ref_auto = _focal_loss_ref(logits, target, gamma=1.0)
    assert jnp.allclose(out_auto, ref_auto, rtol=1e-5, atol=1e-5), (out_auto, ref_auto)

    # bf16 logits path (halved HBM traffic); math stays f32 in-kernel.
    logits_bf16 = logits.astype(jnp.bfloat16)
    out_bf16 = jax.block_until_ready(focal_loss(logits_bf16, target, gamma=1.0, tile_n=TILE_N))
    ref_bf16 = _focal_loss_ref(logits_bf16.astype(jnp.float32), target, gamma=1.0)
    assert jnp.allclose(out_bf16, ref_bf16, rtol=1e-4, atol=1e-4), (out_bf16, ref_bf16)

    # bf16 EUP exp path (v6e/v7x optimization; compiles everywhere, looser tolerance).
    out_e = jax.block_until_ready(focal_loss(logits, target, gamma=2.0, tile_n=TILE_N,
                                             exp_bf16=True))
    ref_e = _focal_loss_ref(logits, target, gamma=2.0)
    assert jnp.allclose(out_e, ref_e, rtol=2e-2, atol=1e-2), (out_e, ref_e)

    print("KERNEL_OK")
</pallas_src>

<mosaic_0001>
module attributes {stable_mosaic.version = 11 : i64} {
  func.func @_focal_loss_kernel(%arg0: i32, %arg1: memref<16x32xf32, #tpu.memory_space<vmem>>, %arg2: memref<16x1xi32, #tpu.memory_space<vmem>>, %arg3: memref<1x8x128xf32, #tpu.memory_space<vmem>>) attributes {dimension_semantics = [#tpu.dimension_semantics<parallel>], iteration_bounds = array<i64: 3>, scalar_prefetch = 0 : i64, scratch_operands = 0 : i64, tpu.core_type = #tpu.core_type<tc>, window_params = [{transform_indices = @transform_0, window_bounds = array<i64: 16, 32>}, {transform_indices = @transform_1, window_bounds = array<i64: 16, 1>}, {transform_indices = @transform_2, window_bounds = array<i64: 1, 8, 128>}]} {
    %c0 = arith.constant 0 : index
    %c0_0 = arith.constant 0 : index
    %0 = vector.load %arg1[%c0, %c0_0] : memref<16x32xf32, #tpu.memory_space<vmem>>, vector<16x32xf32>
    %c0_1 = arith.constant 0 : index
    %c0_2 = arith.constant 0 : index
    %1 = vector.load %arg2[%c0_1, %c0_2] : memref<16x1xi32, #tpu.memory_space<vmem>>, vector<16x1xi32>
    %cst = arith.constant dense<0xFF800000> : vector<16xf32>
    %2 = vector.multi_reduction <maximumf>, %0, %cst [1] : vector<16x32xf32> to vector<16xf32>
    %3 = vector.shape_cast %2 : vector<16xf32> to vector<16x1xf32>
    %4 = vector.broadcast %3 : vector<16x1xf32> to vector<16x32xf32>
    %5 = arith.subf %0, %4 : vector<16x32xf32>
    %6 = math.exp %5 : vector<16x32xf32>
    %cst_3 = arith.constant dense<0.000000e+00> : vector<16xf32>
    %7 = vector.multi_reduction <add>, %6, %cst_3 [1] : vector<16x32xf32> to vector<16xf32>
    %8 = vector.shape_cast %7 : vector<16xf32> to vector<16x1xf32>
    %9 = math.log %8 : vector<16x1xf32>
    %10 = tpu.iota {dimensions = array<i32: 1>} : vector<16x32xi32>
    %11 = vector.broadcast %1 : vector<16x1xi32> to vector<16x32xi32>
    %12 = arith.cmpi eq, %10, %11 : vector<16x32xi32>
    %cst_4 = arith.constant 0.000000e+00 : f32
    %13 = vector.broadcast %cst_4 : f32 to vector<16x32xf32>
    %14 = arith.select %12, %5, %13 : vector<16x32xi1>, vector<16x32xf32>
    %cst_5 = arith.constant dense<0.000000e+00> : vector<16xf32>
    %15 = vector.multi_reduction <add>, %14, %cst_5 [1] : vector<16x32xf32> to vector<16xf32>
    %16 = vector.shape_cast %15 : vector<16xf32> to vector<16x1xf32>
    %17 = arith.subf %9, %16 : vector<16x1xf32>
    %cst_6 = arith.constant 0.000000e+00 : f32
    %18 = vector.broadcast %cst_6 : f32 to vector<16x1xf32>
    %19 = arith.subf %18, %17 : vector<16x1xf32>
    %20 = math.exp %19 : vector<16x1xf32>
    %cst_7 = arith.constant 1.000000e+00 : f32
    %21 = vector.broadcast %cst_7 : f32 to vector<16x1xf32>
    %22 = arith.subf %21, %20 : vector<16x1xf32>
    %cst_8 = arith.constant 0.000000e+00 : f32
    %23 = vector.broadcast %cst_8 : f32 to vector<16x1xf32>
    %24 = arith.maximumf %22, %23 : vector<16x1xf32>
    %25 = tpu.iota {dimensions = array<i32: 0>} : vector<16x1xi32>
    %c16_i32 = arith.constant 16 : i32
    %26 = arith.muli %arg0, %c16_i32 : i32
    %27 = vector.broadcast %26 : i32 to vector<16x1xi32>
    %28 = arith.addi %27, %25 : vector<16x1xi32>
    %c45_i32 = arith.constant 45 : i32
    %29 = vector.broadcast %c45_i32 : i32 to vector<16x1xi32>
    %30 = arith.cmpi slt, %28, %29 : vector<16x1xi32>
    %31 = arith.mulf %24, %17 : vector<16x1xf32>
    %cst_9 = arith.constant 0.000000e+00 : f32
    %32 = vector.broadcast %cst_9 : f32 to vector<16x1xf32>
    %33 = arith.select %30, %31, %32 : vector<16x1xi1>, vector<16x1xf32>
    %34 = vector.shape_cast %33 : vector<16x1xf32> to vector<1x16x1xf32>
    %cst_10 = arith.constant dense<0.000000e+00> : vector<1xf32>
    %35 = vector.multi_reduction <add>, %34, %cst_10 [1, 2] : vector<1x16x1xf32> to vector<1xf32>
    %36 = vector.shape_cast %35 : vector<1xf32> to vector<1x1x1xf32>
    %37 = vector.extract %36[0, 0, 0] : f32 from vector<1x1x1xf32>
    %38 = vector.broadcast %37 : f32 to vector<1x8x128xf32>
    %c0_11 = arith.constant 0 : index
    %c0_12 = arith.constant 0 : index
    %c0_13 = arith.constant 0 : index
    %39 = vector.load %arg3[%c0_11, %c0_12, %c0_13] : memref<1x8x128xf32, #tpu.memory_space<vmem>>, vector<1x8x128xf32>
    tpu.vector_store %arg3[%c0_11, %c0_12, %c0_13], %38 {strides = array<i32>} : memref<1x8x128xf32, #tpu.memory_space<vmem>>, vector<1x8x128xf32>,
    return
  }
  func.func @transform_0(%arg0: i32) -> (i32, i32) {
    %c0_i32 = arith.constant 0 : i32
    %c0_i32_0 = arith.constant 0 : i32
    return %arg0, %c0_i32 : i32, i32
  }
  func.func @transform_1(%arg0: i32) -> (i32, i32) {
    %c0_i32 = arith.constant 0 : i32
    %c0_i32_0 = arith.constant 0 : i32
    return %arg0, %c0_i32 : i32, i32
  }
  func.func @transform_2(%arg0: i32) -> (i32, i32, i32) {
    %c0_i32 = arith.constant 0 : i32
    %c0_i32_0 = arith.constant 0 : i32
    %c0_i32_1 = arith.constant 0 : i32
    return %arg0, %c0_i32, %c0_i32_0 : i32, i32, i32
  }
}

</mosaic_0001>

<llo_original>
// kernel: tpu_custom_call.1
$region0: #{tpu_custom_call.1}
  #allocation0 [shape = 'u32[]', space=smem, size = 0x4, offset = 0x4, fixed_abs, tag = 'smem constant byte address 0x4 - core index']
  #allocation1 [shape = 'u32[144,128]{1,0:T(1,128)}', space=vmem, size = 0x12000, scoped, tag = 'internal scratch']
  %s0 = inlined_call_operand.vmem [shape: f32[45,32], index: 0, kind: input, shape index: {}]
  %s1 = inlined_call_operand.vmem [shape: s32[45,1], index: 1, kind: input, shape index: {}]
  %s2 = inlined_call_operand.hbm [shape: f32[3,8,128], index: 2, kind: output, shape index: {}]
  %s3 = sld [smem:[#allocation0]]
  $region41: #{tpu_custom_call.1} parent=0
    _
  %s5 = ssub.s32 1, %s3
  %s6 = scalar_select 0, %s5, %s3
  $region1: #{tpu_custom_call.1} parent=0
    #allocation2 [shape = 'u8[8192]{0}', space=vmem, size = 0x2000, scoped, tag = 'output window, operand 0']
    #allocation3 [shape = 's32[2]{0}', space=sflag, size = 0x8, scoped, tag = 'scoped memory for tpu_custom_call.1']
    %7 = vsyncpa [#allocation3], 0
    %s8 = scalar_lea.sflag [#allocation3], 1
    %9 = vsyncpa %s8, 0
    loop: start=0, step=1, limit=5
    $region2: #{tpu_custom_call.1} parent=1 // loop_pre_header
      _
    $region3: #{tpu_custom_call.1} parent=1 // loop_header
      %s11 = sphi 0, %s15
      %p12 = scmp.ge.s32.totalorder %s11, 5
      %s21 = sphi 0, %s23
      %s24 = sphi 0, %s21
      %s25 = sphi 0, %s24
      %s41 = sphi 0, %s25
      %s47 = sphi 0, %s49
      %s50 = sphi 0, %s47
      %s51 = sphi 0, %s50
      %s67 = sphi 0, %s51
      %s73 = sphi 0, %s75
      %s76 = sphi 0, %s73
      %s77 = sphi 0, %s76
      %s93 = sphi 0, %s77
    $region4: #{tpu_custom_call.1} parent=1 // loop_header_branch
      %14 = sbr.rel (%p12) target = $region8
    $region5: #{tpu_custom_call.1} parent=1 // loop_body
      %s16 = ssub.s32 %s11, 1
      %s17 = ssub.s32 %s11, 2
      %s18 = sadd.s32 %s11, 1
      %s19 = ssub.s32 %s11, %s18
      %p20 = scmp.eq.s32.totalorder %s19, 0
      %s22 = sadd.s32 %s21, 1
      %s23 = scalar_select %p20, %s21, %s22
      %p26 = pneg %p20
      %p27 = scmp.eq.s32.totalorder %s11, 2
      %p28 = por %p26, %p27
      %p29 = scmp.ne.s32.totalorder %s21, %s24
      %p30 = scmp.eq.s32.totalorder %s11, 0
      %p31 = por %p29, %p30
      %p32 = scmp.ne.s32.totalorder %s21, %s24
      %p33 = scmp.eq.s32.totalorder %s16, 2
      %p34 = por %p32, %p33
      %p35 = scmp.ne.s32.totalorder %s24, %s25
      %p36 = scmp.eq.s32.totalorder %s16, 0
      %p37 = por %p35, %p36
      %p38 = scmp.ne.s32.totalorder %s24, %s25
      %p39 = scmp.eq.s32.totalorder %s17, 2
      %p40 = por %p38, %p39
      %p42 = scmp.ne.s32.totalorder %s25, %s41
      %p43 = scmp.eq.s32.totalorder %s17, 0
      %p44 = por %p42, %p43
      %s45 = ssub.s32 %s11, %s18
      %p46 = scmp.eq.s32.totalorder %s45, 0
      %s48 = sadd.s32 %s47, 1
      %s49 = scalar_select %p46, %s47, %s48
      %p52 = pneg %p46
      %p53 = scmp.eq.s32.totalorder %s11, 2
      %p54 = por %p52, %p53
      %p55 = scmp.ne.s32.totalorder %s47, %s50
      %p56 = scmp.eq.s32.totalorder %s11, 0
      %p57 = por %p55, %p56
      %p58 = scmp.ne.s32.totalorder %s47, %s50
      %p59 = scmp.eq.s32.totalorder %s16, 2
      %p60 = por %p58, %p59
      %p61 = scmp.ne.s32.totalorder %s50, %s51
      %p62 = scmp.eq.s32.totalorder %s16, 0
      %p63 = por %p61, %p62
      %p64 = scmp.ne.s32.totalorder %s50, %s51
      %p65 = scmp.eq.s32.totalorder %s17, 2
      %p66 = por %p64, %p65
      %p68 = scmp.ne.s32.totalorder %s51, %s67
      %p69 = scmp.eq.s32.totalorder %s17, 0
      %p70 = por %p68, %p69
      %s71 = ssub.s32 %s11, %s18
      %p72 = scmp.eq.s32.totalorder %s71, 0
      %s74 = sadd.s32 %s73, 1
      %s75 = scalar_select %p72, %s73, %s74
      %p78 = pneg %p72
      %p79 = scmp.eq.s32.totalorder %s11, 2
      %p80 = por %p78, %p79
      %p81 = scmp.ne.s32.totalorder %s73, %s76
      %p82 = scmp.eq.s32.totalorder %s11, 0
      %p83 = por %p81, %p82
      %p84 = scmp.ne.s32.totalorder %s73, %s76
      %p85 = scmp.eq.s32.totalorder %s16, 2
      %p86 = por %p84, %p85
      %p87 = scmp.ne.s32.totalorder %s76, %s77
      %p88 = scmp.eq.s32.totalorder %s16, 0
      %p89 = por %p87, %p88
      %p90 = scmp.ne.s32.totalorder %s76, %s77
      %p91 = scmp.eq.s32.totalorder %s17, 2
      %p92 = por %p90, %p91
      %p94 = scmp.ne.s32.totalorder %s77, %s93
      %p95 = scmp.eq.s32.totalorder %s17, 0
      %p96 = por %p94, %p95
      %p97 = scmp.le.s32.totalorder 1, %s11
      %p98 = scmp.lt.s32.totalorder %s11, 4
      %p99 = pnand %p97, %p98
      %p100 = pneg %p99
      // Predicated region
      $region9: #{tpu_custom_call.1} parent=5 // pred_check
        _
      $region10: #{tpu_custom_call.1} parent=5 // pred_check_branch
        %102 = sbr.rel (%p99) target = $region12
      $region11: #{tpu_custom_call.1} parent=5 // pred_region
        %s103 = ssub.s32 %s11, 1
      $region12: #{tpu_custom_call.1} parent=5 // pred_fallthru
        _
      %p104 = scmp.lt.s32.totalorder %s11, 3
      // Predicated region
      $region13: #{tpu_custom_call.1} parent=5 // pred_check
        %p105 = pneg %p104
      $region14: #{tpu_custom_call.1} parent=5 // pred_check_branch
        %107 = sbr.rel (%p105) target = $region16
      $region15: #{tpu_custom_call.1} parent=5 // pred_region
        // Predicated region
        $region17: #{tpu_custom_call.1} parent=15 // pred_check
          %p108 = pneg %p31
        $region18: #{tpu_custom_call.1} parent=15 // pred_check_branch
          %110 = sbr.rel (%p108) target = $region20
        $region19: #{tpu_custom_call.1} parent=15 // pred_region
          %s111 = smul.u32 2, %s11
          %p112 = scmp.lt.s32.totalorder %s111, 5
          %s113 = scalar_select %p112, %s111, 5
          %s114 = smul.addr %s113, 8
          %s115 = scalar_lea.vmem %s0, %s114
          %s116 = smul.u32 2, %s11
        $region20: #{tpu_custom_call.1} parent=15 // pred_fallthru
          _
        // Predicated region
        $region21: #{tpu_custom_call.1} parent=15 // pred_check
          %p117 = pneg %p57
        $region22: #{tpu_custom_call.1} parent=15 // pred_check_branch
          %119 = sbr.rel (%p117) target = $region24
        $region23: #{tpu_custom_call.1} parent=15 // pred_region
          %s120 = smul.u32 2, %s11
          %p121 = scmp.lt.s32.totalorder %s120, 5
          %s122 = scalar_select %p121, %s120, 5
          %s123 = smul.addr %s122, 8
          %s124 = scalar_lea.vmem %s1, %s123
          %s125 = smul.u32 2, %s11
        $region24: #{tpu_custom_call.1} parent=15 // pred_fallthru
          _
      $region16: #{tpu_custom_call.1} parent=5 // pred_fallthru
        _
      %p126 = scmp.le.s32.totalorder 1, %s11
      %p127 = scmp.lt.s32.totalorder %s11, 4
      %p128 = pnand %p126, %p127
      %p129 = pneg %p128
      // Predicated region
      $region25: #{tpu_custom_call.1} parent=5 // pred_check
        _
      $region26: #{tpu_custom_call.1} parent=5 // pred_check_branch
        %131 = sbr.rel (%p128) target = $region28
      $region27: #{tpu_custom_call.1} parent=5 // pred_region
        %s132 = ssub.s32 %s11, 1
        %s133 = smul.u32 2, %s16
        %p134 = scmp.lt.s32.totalorder %s133, 5
        %s135 = scalar_select %p134, %s133, 5
        %s136 = smul.addr %s135, 8
        %s137 = scalar_lea.vmem %s0, %s136
        %p138 = pneg %p37
        %p139 = pneg %p34
        %s140 = smul.u32 2, %s16
        %p141 = scmp.lt.s32.totalorder %s140, 5
        %s142 = scalar_select %p141, %s140, 5
        %s143 = smul.addr %s142, 8
        %s144 = scalar_lea.vmem %s1, %s143
        %p145 = pneg %p63
        %p146 = pneg %p60
        %p147 = pneg %p89
        %p148 = pneg %p86
        %s149 = sand.u32 %s76, 1
        %s150 = scalar_lea.sflag [#allocation3], %s149
        %s151 = sand.u32 %s76, 1
        %s152 = smul.addr %s151, 8
        %s153 = scalar_lea.vmem [#allocation2], %s152
        %s154 = smul.u32 2, %s16
        %p155 = scmp.lt.s32.totalorder %s154, 5
        %s156 = scalar_select %p155, %s154, 5
        %s157 = smul.addr %s156, 8
        %s158 = scalar_lea.vmem %s0, %s157
        %s159 = smul.u32 2, %s16
        %s160 = smul.u32 2, %s16
        %p161 = scmp.lt.s32.totalorder %s160, 5
        %s162 = scalar_select %p161, %s160, 5
        %s163 = smul.addr %s162, 8
        %s164 = scalar_lea.vmem %s1, %s163
        %s165 = smul.u32 2, %s16
        %v166 = vld [vmem:[%s158] sm:$0xff]
        %v167 = vld [vmem:[%s158 + $0x8] sm:$0xff]
        %v168 = vld [vmem:[%s164] sm:$0xff]
        %v169 = vld [vmem:[%s164 + $0x8] sm:$0xff]
        %vm170 = vcmask 261120
        %v171 = vsel %vm170, %v166, -inf
        %172 = vmax.xlane.f32.xlu0 %v171
        %v173 = vpop.xlane.xlu0 %172
        %v174 = vsel %vm170, %v167, -inf
        %175 = vmax.xlane.f32.xlu0 %v174
        %v176 = vpop.xlane.xlu0 %175
        %v177 = vsub.f32 %v166, %v173
        %v178 = vsub.f32 %v167, %v176
        %v179 = vmul.f32 %v177, 1.442695
        %v180 = vpow.pop %v179
        %v181 = vmul.f32 %v178, 1.442695
        %v182 = vpow.pop %v181
        %v183 = vsel %vm170, %v180, 0.0
        %184 = vadd.xlane.f32.xlu0 %v183
        %v185 = vpop.xlane.xlu0 %184
        %v186 = vsel %vm170, %v182, 0.0
        %187 = vadd.xlane.f32.xlu0 %v186
        %v188 = vpop.xlane.xlu0 %187
        %v189 = vlog2.pop %v185
        %v190 = vmul.f32 %v189, 0.6931472
        %v191 = vlog2.pop %v188
        %v192 = vmul.f32 %v191, 0.6931472
        %v193 = vlaneseq
        %v194 = vand.u32 %v193, 127
        %195 = vset.pattern.permute.xlu0 0
        %196 = vperm.xlu0 %195, %v168
        %v197 = vpop.permute.xlu0 %196
        %198 = vset.pattern.permute.xlu0 0
        %199 = vperm.xlu0 %198, %v169
        %v200 = vpop.permute.xlu0 %199
        %vm201 = vcmp.eq.s32.totalorder %v194, %v197
        %vm202 = vcmp.eq.s32.totalorder %v194, %v200
        %v203 = vsel %vm201, %v177, 0.0
        %v204 = vsel %vm202, %v178, 0.0
        %v205 = vsel %vm170, %v203, 0.0
        %206 = vadd.xlane.f32.xlu0 %v205
        %v207 = vpop.xlane.xlu0 %206
        %v208 = vsel %vm170, %v204, 0.0
        %209 = vadd.xlane.f32.xlu0 %v208
        %v210 = vpop.xlane.xlu0 %209
        %v211 = vsub.f32 %v190, %v207
        %v212 = vsub.f32 %v192, %v210
        %v213 = vsub.f32 0.0, %v211
        %v214 = vsub.f32 0.0, %v212
        %v215 = vmul.f32 %v213, 1.442695
        %v216 = vpow.pop %v215
        %v217 = vmul.f32 %v214, 1.442695
        %v218 = vpow.pop %v217
        %v219 = vsub.f32 1.0, %v216
        %v220 = vsub.f32 1.0, %v218
        %v221 = vmax.f32 %v219, 0.0
        %v222 = vmax.f32 %v220, 0.0
        %v223 = vlaneseq
        %v224 = vshrl.u32 %v223, 7
        %v225 = vadd.s32 %v224, 8
        %s226 = smul.u32 %s16, 16
        %v227 = vstv %s226
        %v228 = vadd.s32 %v227, %v224
        %v229 = vadd.s32 %v227, %v225
        %vm230 = vcmp.lt.s32.totalorder %v228, 45
        %vm231 = vcmp.lt.s32.totalorder %v229, 45
        %v232 = vmul.f32 %v221, %v211
        %v233 = vmul.f32 %v222, %v212
        %v234 = vsel %vm230, %v232, 0.0
        %v235 = vsel %vm231, %v233, 0.0
        %vm236 = vcmask 7168
        %v237 = vsel %vm236, %v234, 0.0
        %v238 = vsel %vm236, %v235, 0.0
        %v239 = vadd.f32 %v237, %v238
        %240 = vadd.xlane.f32.xlu0 %v239
        %v241 = vpop.xlane.xlu0 %240
        %v242 = vrot.slane %v241, 4
        %v243 = vadd.f32 %v241, %v242
        %v244 = vrot.slane %v243, 2
        %v245 = vadd.f32 %v243, %v244
        %v246 = vrot.slane %v245, 1
        %v247 = vadd.f32 %v245, %v246
        %s248 = vtos %v247
        %v249 = vstv %s248
        %250 = vst [vmem:[%s153] sm:$0xff] %v249
        %s251 = sand.u32 %s76, 1
        %s252 = scalar_lea.sflag [#allocation3], %s251
        %s253 = sand.u32 %s76, 1
        %s254 = smul.addr %s253, 8
        %s255 = scalar_lea.vmem [#allocation2], %s254
        // Predicated region
        $region29: #{tpu_custom_call.1} parent=27 // pred_check
          %p256 = pneg %p86
        $region30: #{tpu_custom_call.1} parent=27 // pred_check_branch
          %258 = sbr.rel (%p256) target = $region32
        $region31: #{tpu_custom_call.1} parent=27 // pred_region
          %s260 = ssub.s32 128, 128
          %261 = vsyncadd %s252, %s260
          %s262 = smul.addr %s16, 128
          %s263 = scalar_lea.hbm %s2, %s262
          %s265 = sshll.u32 %s255, 4
          %s266 = int_to_ptr.vmem [resolvable:$true] %s265
          %268 = dma.vmem_to_hbm [thread:$0]  %s266, 128, %s263, %s252
        $region32: #{tpu_custom_call.1} parent=27 // pred_fallthru
          _
      $region28: #{tpu_custom_call.1} parent=5 // pred_fallthru
        _
      %p269 = scmp.le.s32.totalorder 2, %s11
      // Predicated region
      $region33: #{tpu_custom_call.1} parent=5 // pred_check
        %p270 = pneg %p269
      $region34: #{tpu_custom_call.1} parent=5 // pred_check_branch
        %272 = sbr.rel (%p270) target = $region36
      $region35: #{tpu_custom_call.1} parent=5 // pred_region
        %s273 = ssub.s32 %s11, 2
        // Predicated region
        $region37: #{tpu_custom_call.1} parent=35 // pred_check
          %p274 = pneg %p92
        $region38: #{tpu_custom_call.1} parent=35 // pred_check_branch
          %276 = sbr.rel (%p274) target = $region40
        $region39: #{tpu_custom_call.1} parent=35 // pred_region
          %s277 = sand.u32 %s77, 1
          %s278 = scalar_lea.sflag [#allocation3], %s277
          %s279 = sand.u32 %s77, 1
          %s280 = smul.addr %s279, 8
          %s281 = scalar_lea.vmem [#allocation2], %s280
          %282 = dma.done %s278, 128
        $region40: #{tpu_custom_call.1} parent=35 // pred_fallthru
          _
      $region36: #{tpu_custom_call.1} parent=5 // pred_fallthru
        _
    $region6: #{tpu_custom_call.1} parent=1 // loop_footer
      %s15 = sadd.s32 1, %s11
    $region7: #{tpu_custom_call.1} parent=1 // loop_footer_branch
      %10 = sbr.rel target = $region3
    $region8: #{tpu_custom_call.1} parent=1 // loop_exit
      _
    %283 = vsyncpa [#allocation3], 1
    %s284 = scalar_lea.sflag [#allocation3], 1
    %285 = vsyncpa %s284, 1

</llo_original>
